<compile_context>
chip_gen: v6e
topology: v6e:2x2x1
jax: 0.10.0
libtpu: 0.0.40
codegen_flags: <defaults>
</compile_context>

<pallas_src>
import functools

import jax
import jax.numpy as jnp
from jax.experimental import pallas as pl
from jax.experimental.pallas import tpu as pltpu

HIDDEN = 256
HEAD_LANES = 128      # lane width of the packed two-head layer-3 weight
HEAD2_LANE = 64       # lane holding Q2 (Q1 sits in lane 0)


def _round_up(x, m):
    return (x + m - 1) // m * m


def _twinq_kernel(s_ref, a_ref, w1s_ref, w1a_ref, b1_ref, w2_ref, b2_ref,
                  w3_ref, b3_ref, o_ref):
    # ---- Layer 1: Linear(state_dim + action_dim -> 256) + ReLU, as a split-K
    # pair of matmuls (no concatenated / lane-padded input needed).
    h = jnp.dot(s_ref[...].astype(jnp.bfloat16), w1s_ref[...],
                preferred_element_type=jnp.float32)
    h = h + jnp.dot(a_ref[...].astype(jnp.bfloat16), w1a_ref[...],
                    preferred_element_type=jnp.float32)
    h = jnp.maximum(h + b1_ref[...], 0.0)

    # ---- Layer 2: Linear(256 -> 256) + ReLU.
    h = jnp.dot(h.astype(jnp.bfloat16), w2_ref[...],
                preferred_element_type=jnp.float32)
    h = jnp.maximum(h + b2_ref[...], 0.0)

    # ---- Layer 3: both width-1 heads in one lane-dense (256, 128) matmul.
    # Lane 0 = q1, lane HEAD2_LANE = q2, every other lane is exactly 0.
    q = jnp.dot(h.astype(jnp.bfloat16), w3_ref[...],
                preferred_element_type=jnp.float32) + b3_ref[...]

    # ---- forward = min(q1, q2), written back lane-dense: transpose the
    # (tile_b, 128) block on the XLU (slack slot) and store one unmasked
    # (1, tile_b) f32 row.
    qt = q.T                                   # (128, tile_b)
    o_ref[...] = jnp.minimum(qt[0:1, :], qt[HEAD2_LANE:HEAD2_LANE + 1, :])


def _choose_tile_b(batch, requested):
    """Largest 128-aligned batch tile <= requested that still leaves at least
    min(4, ceil(batch/128)) grid steps (v7x megacore sharding + pipelining)."""
    requested = max(128, _round_up(requested, 128))
    tile_b = min(requested, _round_up(batch, 128))
    desired_tiles = min(4, pl.cdiv(batch, 128))
    while tile_b > 128 and pl.cdiv(batch, tile_b) < desired_tiles:
        tile_b -= 128
    return tile_b


@functools.partial(jax.jit, static_argnames=("tile_b",))
def twinq_forward(state, action, params, *, tile_b=1024):
    """min(Q1(s,a), Q2(s,a)) of the TwinQ module, computed in one Pallas kernel."""
    w1, b1 = params["q1l1_w"], params["q1l1_b"]
    w2, b2 = params["q1l2_w"], params["q1l2_b"]
    w3q1, b3q1 = params["q1l3_w"], params["q1l3_b"]
    w3q2, b3q2 = params["q2l3_w"], params["q2l3_b"]
    # q2l1 / q2l2 are intentionally unused: the reference `both()` runs the
    # q1l1/q1l2 trunk for both branches.

    batch, state_dim = state.shape
    action_dim = action.shape[1]

    tile_b = _choose_tile_b(batch, tile_b)
    batch_pad = _round_up(batch, tile_b)
    num_tiles = batch_pad // tile_b

    # Batch padding only (no feature-dim concat/pad/cast passes over the
    # activations; this is a no-op when the batch is already tile-aligned).
    if batch_pad != batch:
        pad = ((0, batch_pad - batch), (0, 0))
        state_in = jnp.pad(state, pad)
        action_in = jnp.pad(action, pad)
    else:
        state_in, action_in = state, action

    # Weights: bf16 MXU operands; layer-1 weight split into state/action parts;
    # the two width-1 heads packed lane-wise into a (256, 128) weight.
    w1s = w1[:state_dim].astype(jnp.bfloat16)              # (state_dim, 256)
    w1a = w1[state_dim:].astype(jnp.bfloat16)              # (action_dim, 256)
    w2p = w2.astype(jnp.bfloat16)                           # (256, 256)
    w3p = jnp.zeros((HIDDEN, HEAD_LANES), jnp.bfloat16)
    w3p = w3p.at[:, 0].set(w3q1.reshape(HIDDEN).astype(jnp.bfloat16))
    w3p = w3p.at[:, HEAD2_LANE].set(w3q2.reshape(HIDDEN).astype(jnp.bfloat16))

    b1p = b1.reshape(1, HIDDEN).astype(jnp.float32)
    b2p = b2.reshape(1, HIDDEN).astype(jnp.float32)
    b3p = jnp.zeros((1, HEAD_LANES), jnp.float32)
    b3p = b3p.at[0, 0].set(b3q1.reshape(()).astype(jnp.float32))
    b3p = b3p.at[0, HEAD2_LANE].set(b3q2.reshape(()).astype(jnp.float32))

    def resident(shape):
        # Same block every grid step -> DMA'd once, stays VMEM-resident.
        # Total resident footprint is ~0.4 MiB, so default double-buffering
        # overhead is negligible; we skip pl.Buffered(1) for portability.
        return pl.BlockSpec(shape, lambda i: (0, 0))

    out = pl.pallas_call(
        _twinq_kernel,
        out_shape=jax.ShapeDtypeStruct((1, batch_pad), jnp.float32),
        grid=(num_tiles,),
        in_specs=[
            pl.BlockSpec((tile_b, state_dim), lambda i: (i, 0)),   # batch-tiled
            pl.BlockSpec((tile_b, action_dim), lambda i: (i, 0)),  # batch-tiled
            resident((state_dim, HIDDEN)),
            resident((action_dim, HIDDEN)),
            resident((1, HIDDEN)),
            resident((HIDDEN, HIDDEN)),
            resident((1, HIDDEN)),
            resident((HIDDEN, HEAD_LANES)),
            resident((1, HEAD_LANES)),
        ],
        # Lane-dense (1, tile_b) output row per grid step.
        out_specs=pl.BlockSpec((1, tile_b), lambda i: (0, i)),
        compiler_params=pltpu.CompilerParams(
            dimension_semantics=("parallel",),   # shard batch tiles across TCs (v7x)
            vmem_limit_bytes=32 * 1024 * 1024,   # bump v5e's 16 MiB default; v7x headroom
        ),
    )(state_in, action_in, w1s, w1a, b1p, w2p, b2p, w3p, b3p)

    # (1, batch_pad) -> (batch, 1), dropping batch padding.
    return out[0, :batch][:, None].astype(state.dtype)


def init_params(key, state_dim, action_dim, hidden=HIDDEN, dtype=jnp.float32):
    """PyTorch nn.Linear-style init (uniform(+-1/sqrt(fan_in))).
    Weights stored [in, out] (transpose of torch), biases [1, out].
    q2l1/q2l2 are created to mirror the module but are unused in forward
    (matching the reference `both()`)."""
    layer_dims = {
        "q1l1": (state_dim + action_dim, hidden),
        "q1l2": (hidden, hidden),
        "q1l3": (hidden, 1),
        "q2l1": (state_dim + action_dim, hidden),
        "q2l2": (hidden, hidden),
        "q2l3": (hidden, 1),
    }
    keys = jax.random.split(key, 2 * len(layer_dims))
    params = {}
    for i, (name, (fan_in, fan_out)) in enumerate(layer_dims.items()):
        bound = 1.0 / (fan_in ** 0.5)
        params[f"{name}_w"] = jax.random.uniform(
            keys[2 * i], (fan_in, fan_out), dtype, -bound, bound)
        params[f"{name}_b"] = jax.random.uniform(
            keys[2 * i + 1], (1, fan_out), dtype, -bound, bound)
    return params


def _reference_forward(state, action, params):
    # Mirrors TwinQ.forward / TwinQ.both exactly (including the q1-trunk reuse).
    sa = jnp.concatenate([state, action], axis=1)
    a = jax.nn.relu(sa @ params["q1l1_w"] + params["q1l1_b"])
    a = jax.nn.relu(a @ params["q1l2_w"] + params["q1l2_b"])
    b = jax.nn.relu(sa @ params["q1l1_w"] + params["q1l1_b"])
    b = jax.nn.relu(b @ params["q1l2_w"] + params["q1l2_b"])
    q1 = a @ params["q1l3_w"] + params["q1l3_b"]
    q2 = b @ params["q2l3_w"] + params["q2l3_b"]
    return jnp.minimum(q1, q2)


if __name__ == "__main__":
    key = jax.random.PRNGKey(0)
    k_state, k_action, k_params = jax.random.split(key, 3)

    batch = 500          # non-multiple of 128: exercises the batch-padding path
    state_dim = 16
    action_dim = 8

    state = jax.random.normal(k_state, (batch, state_dim), jnp.float32)
    action = jax.random.normal(k_action, (batch, action_dim), jnp.float32)
    params = init_params(k_params, state_dim, action_dim)

    # The grid-aware chooser clamps the default tile_b=1024 to 128 here,
    # giving 4 batch tiles and exercising the pipelined/parallel grid.
    out = twinq_forward(state, action, params)
    out = jax.block_until_ready(out)

    ref = _reference_forward(state, action, params)
    assert out.shape == (batch, 1), out.shape
    # bf16 MXU operands with f32 accumulation: allow small numerical slack.
    max_err = float(jnp.max(jnp.abs(out - ref)))
    assert jnp.allclose(out, ref, atol=2e-2, rtol=2e-2), f"max abs err {max_err}"

    print("KERNEL_OK")
</pallas_src>

<mosaic_0001>
module attributes {stable_mosaic.version = 11 : i64} {
  func.func @_twinq_kernel(%arg0: i32, %arg1: memref<128x16xf32, #tpu.memory_space<vmem>>, %arg2: memref<128x8xf32, #tpu.memory_space<vmem>>, %arg3: memref<16x256xbf16, #tpu.memory_space<vmem>>, %arg4: memref<8x256xbf16, #tpu.memory_space<vmem>>, %arg5: memref<1x256xf32, #tpu.memory_space<vmem>>, %arg6: memref<256x256xbf16, #tpu.memory_space<vmem>>, %arg7: memref<1x256xf32, #tpu.memory_space<vmem>>, %arg8: memref<256x128xbf16, #tpu.memory_space<vmem>>, %arg9: memref<1x128xf32, #tpu.memory_space<vmem>>, %arg10: memref<1x128xf32, #tpu.memory_space<vmem>>) attributes {dimension_semantics = [#tpu.dimension_semantics<parallel>], iteration_bounds = array<i64: 4>, scalar_prefetch = 0 : i64, scratch_operands = 0 : i64, tpu.core_type = #tpu.core_type<tc>, window_params = [{transform_indices = @transform_0, window_bounds = array<i64: 128, 16>}, {transform_indices = @transform_1, window_bounds = array<i64: 128, 8>}, {pipeline_mode = #tpu.pipeline_mode<synchronous>, transform_indices = @transform_2, window_bounds = array<i64: 16, 256>}, {pipeline_mode = #tpu.pipeline_mode<synchronous>, transform_indices = @transform_3, window_bounds = array<i64: 8, 256>}, {pipeline_mode = #tpu.pipeline_mode<synchronous>, transform_indices = @transform_4, window_bounds = array<i64: 1, 256>}, {pipeline_mode = #tpu.pipeline_mode<synchronous>, transform_indices = @transform_5, window_bounds = array<i64: 256, 256>}, {pipeline_mode = #tpu.pipeline_mode<synchronous>, transform_indices = @transform_6, window_bounds = array<i64: 1, 256>}, {pipeline_mode = #tpu.pipeline_mode<synchronous>, transform_indices = @transform_7, window_bounds = array<i64: 256, 128>}, {pipeline_mode = #tpu.pipeline_mode<synchronous>, transform_indices = @transform_8, window_bounds = array<i64: 1, 128>}, {transform_indices = @transform_9, window_bounds = array<i64: 1, 128>}]} {
    %c0 = arith.constant 0 : index
    %c0_0 = arith.constant 0 : index
    %0 = vector.load %arg1[%c0, %c0_0] : memref<128x16xf32, #tpu.memory_space<vmem>>, vector<128x16xf32>
    %1 = arith.truncf %0 : vector<128x16xf32> to vector<128x16xbf16>
    %c0_1 = arith.constant 0 : index
    %c0_2 = arith.constant 0 : index
    %2 = vector.load %arg3[%c0_1, %c0_2] : memref<16x256xbf16, #tpu.memory_space<vmem>>, vector<16x256xbf16>
    %cst = arith.constant dense<0.000000e+00> : vector<128x256xf32>
    %3 = tpu.matmul %1, %2, %cst {dimension_numbers = #tpu.dot_dimension_numbers<[1], [0], [0], [1], [0, 0, 1, 1], [], []>} : vector<128x16xbf16>, vector<16x256xbf16>, vector<128x256xf32> -> vector<128x256xf32>
    %c0_3 = arith.constant 0 : index
    %c0_4 = arith.constant 0 : index
    %4 = vector.load %arg2[%c0_3, %c0_4] : memref<128x8xf32, #tpu.memory_space<vmem>>, vector<128x8xf32>
    %5 = arith.truncf %4 : vector<128x8xf32> to vector<128x8xbf16>
    %c0_5 = arith.constant 0 : index
    %c0_6 = arith.constant 0 : index
    %6 = vector.load %arg4[%c0_5, %c0_6] : memref<8x256xbf16, #tpu.memory_space<vmem>>, vector<8x256xbf16>
    %cst_7 = arith.constant dense<0.000000e+00> : vector<128x256xf32>
    %7 = tpu.matmul %5, %6, %cst_7 {dimension_numbers = #tpu.dot_dimension_numbers<[1], [0], [0], [1], [0, 0, 1, 1], [], []>} : vector<128x8xbf16>, vector<8x256xbf16>, vector<128x256xf32> -> vector<128x256xf32>
    %8 = arith.addf %3, %7 : vector<128x256xf32>
    %c0_8 = arith.constant 0 : index
    %c0_9 = arith.constant 0 : index
    %9 = vector.load %arg5[%c0_8, %c0_9] : memref<1x256xf32, #tpu.memory_space<vmem>>, vector<1x256xf32>
    %10 = vector.broadcast %9 : vector<1x256xf32> to vector<128x256xf32>
    %11 = arith.addf %8, %10 : vector<128x256xf32>
    %cst_10 = arith.constant 0.000000e+00 : f32
    %12 = vector.broadcast %cst_10 : f32 to vector<128x256xf32>
    %13 = arith.maximumf %11, %12 : vector<128x256xf32>
    %14 = arith.truncf %13 : vector<128x256xf32> to vector<128x256xbf16>
    %c0_11 = arith.constant 0 : index
    %c0_12 = arith.constant 0 : index
    %15 = vector.load %arg6[%c0_11, %c0_12] : memref<256x256xbf16, #tpu.memory_space<vmem>>, vector<256x256xbf16>
    %cst_13 = arith.constant dense<0.000000e+00> : vector<128x256xf32>
    %16 = tpu.matmul %14, %15, %cst_13 {dimension_numbers = #tpu.dot_dimension_numbers<[1], [0], [0], [1], [0, 0, 1, 1], [], []>} : vector<128x256xbf16>, vector<256x256xbf16>, vector<128x256xf32> -> vector<128x256xf32>
    %c0_14 = arith.constant 0 : index
    %c0_15 = arith.constant 0 : index
    %17 = vector.load %arg7[%c0_14, %c0_15] : memref<1x256xf32, #tpu.memory_space<vmem>>, vector<1x256xf32>
    %18 = vector.broadcast %17 : vector<1x256xf32> to vector<128x256xf32>
    %19 = arith.addf %16, %18 : vector<128x256xf32>
    %cst_16 = arith.constant 0.000000e+00 : f32
    %20 = vector.broadcast %cst_16 : f32 to vector<128x256xf32>
    %21 = arith.maximumf %19, %20 : vector<128x256xf32>
    %22 = arith.truncf %21 : vector<128x256xf32> to vector<128x256xbf16>
    %c0_17 = arith.constant 0 : index
    %c0_18 = arith.constant 0 : index
    %23 = vector.load %arg8[%c0_17, %c0_18] : memref<256x128xbf16, #tpu.memory_space<vmem>>, vector<256x128xbf16>
    %cst_19 = arith.constant dense<0.000000e+00> : vector<128x128xf32>
    %24 = tpu.matmul %22, %23, %cst_19 {dimension_numbers = #tpu.dot_dimension_numbers<[1], [0], [0], [1], [0, 0, 1, 1], [], []>} : vector<128x256xbf16>, vector<256x128xbf16>, vector<128x128xf32> -> vector<128x128xf32>
    %c0_20 = arith.constant 0 : index
    %c0_21 = arith.constant 0 : index
    %25 = vector.load %arg9[%c0_20, %c0_21] : memref<1x128xf32, #tpu.memory_space<vmem>>, vector<1x128xf32>
    %26 = vector.broadcast %25 : vector<1x128xf32> to vector<128x128xf32>
    %27 = arith.addf %24, %26 : vector<128x128xf32>
    %28 = tpu.transpose %27, [1, 0] : vector<128x128xf32> -> vector<128x128xf32>
    %29 = vector.extract_strided_slice %28 {offsets = [0, 0], sizes = [1, 128], strides = [1, 1]} : vector<128x128xf32> to vector<1x128xf32>
    %30 = vector.extract_strided_slice %28 {offsets = [64, 0], sizes = [1, 128], strides = [1, 1]} : vector<128x128xf32> to vector<1x128xf32>
    %31 = arith.minimumf %29, %30 : vector<1x128xf32>
    %c0_22 = arith.constant 0 : index
    %c0_23 = arith.constant 0 : index
    %32 = vector.load %arg10[%c0_22, %c0_23] : memref<1x128xf32, #tpu.memory_space<vmem>>, vector<1x128xf32>
    tpu.vector_store %arg10[%c0_22, %c0_23], %31 {strides = array<i32>} : memref<1x128xf32, #tpu.memory_space<vmem>>, vector<1x128xf32>,
    return
  }
  func.func @transform_0(%arg0: i32) -> (i32, i32) {
    %c0_i32 = arith.constant 0 : i32
    %c0_i32_0 = arith.constant 0 : i32
    return %arg0, %c0_i32 : i32, i32
  }
  func.func @transform_1(%arg0: i32) -> (i32, i32) {
    %c0_i32 = arith.constant 0 : i32
    %c0_i32_0 = arith.constant 0 : i32
    return %arg0, %c0_i32 : i32, i32
  }
  func.func @transform_2(%arg0: i32) -> (i32, i32) {
    %c0_i32 = arith.constant 0 : i32
    %c0_i32_0 = arith.constant 0 : i32
    %c0_i32_1 = arith.constant 0 : i32
    return %c0_i32, %c0_i32_0 : i32, i32
  }
  func.func @transform_3(%arg0: i32) -> (i32, i32) {
    %c0_i32 = arith.constant 0 : i32
    %c0_i32_0 = arith.constant 0 : i32
    %c0_i32_1 = arith.constant 0 : i32
    return %c0_i32, %c0_i32_0 : i32, i32
  }
  func.func @transform_4(%arg0: i32) -> (i32, i32) {
    %c0_i32 = arith.constant 0 : i32
    %c0_i32_0 = arith.constant 0 : i32
    %c0_i32_1 = arith.constant 0 : i32
    return %c0_i32, %c0_i32_0 : i32, i32
  }
  func.func @transform_5(%arg0: i32) -> (i32, i32) {
    %c0_i32 = arith.constant 0 : i32
    %c0_i32_0 = arith.constant 0 : i32
    %c0_i32_1 = arith.constant 0 : i32
    return %c0_i32, %c0_i32_0 : i32, i32
  }
  func.func @transform_6(%arg0: i32) -> (i32, i32) {
    %c0_i32 = arith.constant 0 : i32
    %c0_i32_0 = arith.constant 0 : i32
    %c0_i32_1 = arith.constant 0 : i32
    return %c0_i32, %c0_i32_0 : i32, i32
  }
  func.func @transform_7(%arg0: i32) -> (i32, i32) {
    %c0_i32 = arith.constant 0 : i32
    %c0_i32_0 = arith.constant 0 : i32
    %c0_i32_1 = arith.constant 0 : i32
    return %c0_i32, %c0_i32_0 : i32, i32
  }
  func.func @transform_8(%arg0: i32) -> (i32, i32) {
    %c0_i32 = arith.constant 0 : i32
    %c0_i32_0 = arith.constant 0 : i32
    %c0_i32_1 = arith.constant 0 : i32
    return %c0_i32, %c0_i32_0 : i32, i32
  }
  func.func @transform_9(%arg0: i32) -> (i32, i32) {
    %c0_i32 = arith.constant 0 : i32
    %c0_i32_0 = arith.constant 0 : i32
    return %c0_i32, %arg0 : i32, i32
  }
}

</mosaic_0001>

<llo_original>
// kernel: twinq_forward.1
$region0: #{twinq_forward.1}
  #allocation0 [shape = 'u32[]', space=smem, size = 0x4, offset = 0x4, fixed_abs, tag = 'smem constant byte address 0x4 - core index']
  #allocation1 [shape = 'u32[144,128]{1,0:T(1,128)}', space=vmem, size = 0x12000, scoped, tag = 'internal scratch']
  %s0 = inlined_call_operand.vmem [shape: f32[512,16], index: 0, kind: input, shape index: {}]
  %s1 = inlined_call_operand.vmem [shape: f32[512,8], index: 1, kind: input, shape index: {}]
  %s2 = inlined_call_operand.vmem [shape: bf16[16,256], index: 2, kind: input, shape index: {}]
  %s3 = inlined_call_operand.vmem [shape: bf16[8,256], index: 3, kind: input, shape index: {}]
  %s4 = inlined_call_operand.vmem [shape: f32[1,256], index: 4, kind: input, shape index: {}]
  %s5 = inlined_call_operand.vmem [shape: bf16[256,256], index: 5, kind: input, shape index: {}]
  %s6 = inlined_call_operand.vmem [shape: f32[1,256], index: 6, kind: input, shape index: {}]
  %s7 = inlined_call_operand.vmem [shape: bf16[256,128], index: 7, kind: input, shape index: {}]
  %s8 = inlined_call_operand.vmem [shape: f32[1,128], index: 8, kind: input, shape index: {}]
  %s9 = inlined_call_operand.vmem [shape: f32[1,512], index: 9, kind: output, shape index: {}]
  %s10 = sld [smem:[#allocation0]]
  $region69: #{twinq_forward.1} parent=0
    _
  %s12 = ssub.s32 1, %s10
  %s13 = scalar_select 0, %s12, %s10
  loop: start=0, step=1, limit=6
  $region2: #{twinq_forward.1} parent=0 // loop_pre_header
    _
  $region3: #{twinq_forward.1} parent=0 // loop_header
    %s15 = sphi 0, %s19
    %p16 = scmp.ge.s32.totalorder %s15, 6
    %s25 = sphi 0, %s27
    %s28 = sphi 0, %s25
    %s29 = sphi 0, %s28
    %s45 = sphi 0, %s29
    %s51 = sphi 0, %s53
    %s54 = sphi 0, %s51
    %s55 = sphi 0, %s54
    %s71 = sphi 0, %s55
    %s75 = sphi 0, %s75
    %s77 = sphi 0, %s75
    %s78 = sphi 0, %s77
    %s92 = sphi 0, %s78
    %s96 = sphi 0, %s96
    %s98 = sphi 0, %s96
    %s99 = sphi 0, %s98
    %s113 = sphi 0, %s99
    %s117 = sphi 0, %s117
    %s119 = sphi 0, %s117
    %s120 = sphi 0, %s119
    %s134 = sphi 0, %s120
    %s138 = sphi 0, %s138
    %s140 = sphi 0, %s138
    %s141 = sphi 0, %s140
    %s155 = sphi 0, %s141
    %s159 = sphi 0, %s159
    %s161 = sphi 0, %s159
    %s162 = sphi 0, %s161
    %s176 = sphi 0, %s162
    %s180 = sphi 0, %s180
    %s182 = sphi 0, %s180
    %s183 = sphi 0, %s182
    %s197 = sphi 0, %s183
    %s201 = sphi 0, %s201
    %s203 = sphi 0, %s201
    %s204 = sphi 0, %s203
    %s218 = sphi 0, %s204
    %s224 = sphi 0, %s226
    %s227 = sphi 0, %s224
    %s228 = sphi 0, %s227
    %s244 = sphi 0, %s228
  $region4: #{twinq_forward.1} parent=0 // loop_header_branch
    %18 = sbr.rel (%p16) target = $region8
  $region5: #{twinq_forward.1} parent=0 // loop_body
    %s20 = ssub.s32 %s15, 1
    %s21 = ssub.s32 %s15, 2
    %s22 = sadd.s32 %s15, 1
    %s23 = ssub.s32 %s15, %s22
    %p24 = scmp.eq.s32.totalorder %s23, 0
    %s26 = sadd.s32 %s25, 1
    %s27 = scalar_select %p24, %s25, %s26
    %p30 = pneg %p24
    %p31 = scmp.eq.s32.totalorder %s15, 3
    %p32 = por %p30, %p31
    %p33 = scmp.ne.s32.totalorder %s25, %s28
    %p34 = scmp.eq.s32.totalorder %s15, 0
    %p35 = por %p33, %p34
    %p36 = scmp.ne.s32.totalorder %s25, %s28
    %p37 = scmp.eq.s32.totalorder %s20, 3
    %p38 = por %p36, %p37
    %p39 = scmp.ne.s32.totalorder %s28, %s29
    %p40 = scmp.eq.s32.totalorder %s20, 0
    %p41 = por %p39, %p40
    %p42 = scmp.ne.s32.totalorder %s28, %s29
    %p43 = scmp.eq.s32.totalorder %s21, 3
    %p44 = por %p42, %p43
    %p46 = scmp.ne.s32.totalorder %s29, %s45
    %p47 = scmp.eq.s32.totalorder %s21, 0
    %p48 = por %p46, %p47
    %s49 = ssub.s32 %s15, %s22
    %p50 = scmp.eq.s32.totalorder %s49, 0
    %s52 = sadd.s32 %s51, 1
    %s53 = scalar_select %p50, %s51, %s52
    %p56 = pneg %p50
    %p57 = scmp.eq.s32.totalorder %s15, 3
    %p58 = por %p56, %p57
    %p59 = scmp.ne.s32.totalorder %s51, %s54
    %p60 = scmp.eq.s32.totalorder %s15, 0
    %p61 = por %p59, %p60
    %p62 = scmp.ne.s32.totalorder %s51, %s54
    %p63 = scmp.eq.s32.totalorder %s20, 3
    %p64 = por %p62, %p63
    %p65 = scmp.ne.s32.totalorder %s54, %s55
    %p66 = scmp.eq.s32.totalorder %s20, 0
    %p67 = por %p65, %p66
    %p68 = scmp.ne.s32.totalorder %s54, %s55
    %p69 = scmp.eq.s32.totalorder %s21, 3
    %p70 = por %p68, %p69
    %p72 = scmp.ne.s32.totalorder %s55, %s71
    %p73 = scmp.eq.s32.totalorder %s21, 0
    %p74 = por %p72, %p73
    %s76 = sadd.s32 %s75, 1
    %p79 = scmp.eq.s32.totalorder %s15, 3
    %p80 = scmp.ne.s32.totalorder %s75, %s77
    %p81 = scmp.eq.s32.totalorder %s15, 0
    %p82 = por %p80, %p81
    %p83 = scmp.ne.s32.totalorder %s75, %s77
    %p84 = scmp.eq.s32.totalorder %s20, 3
    %p85 = por %p83, %p84
    %p86 = scmp.ne.s32.totalorder %s77, %s78
    %p87 = scmp.eq.s32.totalorder %s20, 0
    %p88 = por %p86, %p87
    %p89 = scmp.ne.s32.totalorder %s77, %s78
    %p90 = scmp.eq.s32.totalorder %s21, 3
    %p91 = por %p89, %p90
    %p93 = scmp.ne.s32.totalorder %s78, %s92
    %p94 = scmp.eq.s32.totalorder %s21, 0
    %p95 = por %p93, %p94
    %s97 = sadd.s32 %s96, 1
    %p100 = scmp.eq.s32.totalorder %s15, 3
    %p101 = scmp.ne.s32.totalorder %s96, %s98
    %p102 = scmp.eq.s32.totalorder %s15, 0
    %p103 = por %p101, %p102
    %p104 = scmp.ne.s32.totalorder %s96, %s98
    %p105 = scmp.eq.s32.totalorder %s20, 3
    %p106 = por %p104, %p105
    %p107 = scmp.ne.s32.totalorder %s98, %s99
    %p108 = scmp.eq.s32.totalorder %s20, 0
    %p109 = por %p107, %p108
    %p110 = scmp.ne.s32.totalorder %s98, %s99
    %p111 = scmp.eq.s32.totalorder %s21, 3
    %p112 = por %p110, %p111
    %p114 = scmp.ne.s32.totalorder %s99, %s113
    %p115 = scmp.eq.s32.totalorder %s21, 0
    %p116 = por %p114, %p115
    %s118 = sadd.s32 %s117, 1
    %p121 = scmp.eq.s32.totalorder %s15, 3
    %p122 = scmp.ne.s32.totalorder %s117, %s119
    %p123 = scmp.eq.s32.totalorder %s15, 0
    %p124 = por %p122, %p123
    %p125 = scmp.ne.s32.totalorder %s117, %s119
    %p126 = scmp.eq.s32.totalorder %s20, 3
    %p127 = por %p125, %p126
    %p128 = scmp.ne.s32.totalorder %s119, %s120
    %p129 = scmp.eq.s32.totalorder %s20, 0
    %p130 = por %p128, %p129
    %p131 = scmp.ne.s32.totalorder %s119, %s120
    %p132 = scmp.eq.s32.totalorder %s21, 3
    %p133 = por %p131, %p132
    %p135 = scmp.ne.s32.totalorder %s120, %s134
    %p136 = scmp.eq.s32.totalorder %s21, 0
    %p137 = por %p135, %p136
    %s139 = sadd.s32 %s138, 1
    %p142 = scmp.eq.s32.totalorder %s15, 3
    %p143 = scmp.ne.s32.totalorder %s138, %s140
    %p144 = scmp.eq.s32.totalorder %s15, 0
    %p145 = por %p143, %p144
    %p146 = scmp.ne.s32.totalorder %s138, %s140
    %p147 = scmp.eq.s32.totalorder %s20, 3
    %p148 = por %p146, %p147
    %p149 = scmp.ne.s32.totalorder %s140, %s141
    %p150 = scmp.eq.s32.totalorder %s20, 0
    %p151 = por %p149, %p150
    %p152 = scmp.ne.s32.totalorder %s140, %s141
    %p153 = scmp.eq.s32.totalorder %s21, 3
    %p154 = por %p152, %p153
    %p156 = scmp.ne.s32.totalorder %s141, %s155
    %p157 = scmp.eq.s32.totalorder %s21, 0
    %p158 = por %p156, %p157
    %s160 = sadd.s32 %s159, 1
    %p163 = scmp.eq.s32.totalorder %s15, 3
    %p164 = scmp.ne.s32.totalorder %s159, %s161
    %p165 = scmp.eq.s32.totalorder %s15, 0
    %p166 = por %p164, %p165
    %p167 = scmp.ne.s32.totalorder %s159, %s161
    %p168 = scmp.eq.s32.totalorder %s20, 3
    %p169 = por %p167, %p168
    %p170 = scmp.ne.s32.totalorder %s161, %s162
    %p171 = scmp.eq.s32.totalorder %s20, 0
    %p172 = por %p170, %p171
    %p173 = scmp.ne.s32.totalorder %s161, %s162
    %p174 = scmp.eq.s32.totalorder %s21, 3
    %p175 = por %p173, %p174
    %p177 = scmp.ne.s32.totalorder %s162, %s176
    %p178 = scmp.eq.s32.totalorder %s21, 0
    %p179 = por %p177, %p178
    %s181 = sadd.s32 %s180, 1
    %p184 = scmp.eq.s32.totalorder %s15, 3
    %p185 = scmp.ne.s32.totalorder %s180, %s182
    %p186 = scmp.eq.s32.totalorder %s15, 0
    %p187 = por %p185, %p186
    %p188 = scmp.ne.s32.totalorder %s180, %s182
    %p189 = scmp.eq.s32.totalorder %s20, 3
    %p190 = por %p188, %p189
    %p191 = scmp.ne.s32.totalorder %s182, %s183
    %p192 = scmp.eq.s32.totalorder %s20, 0
    %p193 = por %p191, %p192
    %p194 = scmp.ne.s32.totalorder %s182, %s183
    %p195 = scmp.eq.s32.totalorder %s21, 3
    %p196 = por %p194, %p195
    %p198 = scmp.ne.s32.totalorder %s183, %s197
    %p199 = scmp.eq.s32.totalorder %s21, 0
    %p200 = por %p198, %p199
    %s202 = sadd.s32 %s201, 1
    %p205 = scmp.eq.s32.totalorder %s15, 3
    %p206 = scmp.ne.s32.totalorder %s201, %s203
    %p207 = scmp.eq.s32.totalorder %s15, 0
    %p208 = por %p206, %p207
    %p209 = scmp.ne.s32.totalorder %s201, %s203
    %p210 = scmp.eq.s32.totalorder %s20, 3
    %p211 = por %p209, %p210
    %p212 = scmp.ne.s32.totalorder %s203, %s204
    %p213 = scmp.eq.s32.totalorder %s20, 0
    %p214 = por %p212, %p213
    %p215 = scmp.ne.s32.totalorder %s203, %s204
    %p216 = scmp.eq.s32.totalorder %s21, 3
    %p217 = por %p215, %p216
    %p219 = scmp.ne.s32.totalorder %s204, %s218
    %p220 = scmp.eq.s32.totalorder %s21, 0
    %p221 = por %p219, %p220
    %s222 = ssub.s32 %s15, %s22
    %p223 = scmp.eq.s32.totalorder %s222, 0
    %s225 = sadd.s32 %s224, 1
    %s226 = scalar_select %p223, %s224, %s225
    %p229 = pneg %p223
    %p230 = scmp.eq.s32.totalorder %s15, 3
    %p231 = por %p229, %p230
    %p232 = scmp.ne.s32.totalorder %s224, %s227
    %p233 = scmp.eq.s32.totalorder %s15, 0
    %p234 = por %p232, %p233
    %p235 = scmp.ne.s32.totalorder %s224, %s227
    %p236 = scmp.eq.s32.totalorder %s20, 3
    %p237 = por %p235, %p236
    %p238 = scmp.ne.s32.totalorder %s227, %s228
    %p239 = scmp.eq.s32.totalorder %s20, 0
    %p240 = por %p238, %p239
    %p241 = scmp.ne.s32.totalorder %s227, %s228
    %p242 = scmp.eq.s32.totalorder %s21, 3
    %p243 = por %p241, %p242
    %p245 = scmp.ne.s32.totalorder %s228, %s244
    %p246 = scmp.eq.s32.totalorder %s21, 0
    %p247 = por %p245, %p246
    %p248 = scmp.le.s32.totalorder 1, %s15
    %p249 = scmp.lt.s32.totalorder %s15, 5
    %p250 = pnand %p248, %p249
    %p251 = pneg %p250
    // Predicated region
    $region9: #{twinq_forward.1} parent=5 // pred_check
      _
    $region10: #{twinq_forward.1} parent=5 // pred_check_branch
      %253 = sbr.rel (%p250) target = $region12
    $region11: #{twinq_forward.1} parent=5 // pred_region
      %s254 = ssub.s32 %s15, 1
      // Predicated region
      $region13: #{twinq_forward.1} parent=11 // pred_check
        %p255 = pneg %p88
      $region14: #{twinq_forward.1} parent=11 // pred_check_branch
        %257 = sbr.rel (%p255) target = $region16
      $region15: #{twinq_forward.1} parent=11 // pred_region
        _
      $region16: #{twinq_forward.1} parent=11 // pred_fallthru
        _
      // Predicated region
      $region17: #{twinq_forward.1} parent=11 // pred_check
        %p258 = pneg %p109
      $region18: #{twinq_forward.1} parent=11 // pred_check_branch
        %260 = sbr.rel (%p258) target = $region20
      $region19: #{twinq_forward.1} parent=11 // pred_region
        _
      $region20: #{twinq_forward.1} parent=11 // pred_fallthru
        _
      // Predicated region
      $region21: #{twinq_forward.1} parent=11 // pred_check
        %p261 = pneg %p130
      $region22: #{twinq_forward.1} parent=11 // pred_check_branch
        %263 = sbr.rel (%p261) target = $region24
      $region23: #{twinq_forward.1} parent=11 // pred_region
        _
      $region24: #{twinq_forward.1} parent=11 // pred_fallthru
        _
      // Predicated region
      $region25: #{twinq_forward.1} parent=11 // pred_check
        %p264 = pneg %p151
      $region26: #{twinq_forward.1} parent=11 // pred_check_branch
        %266 = sbr.rel (%p264) target = $region28
      $region27: #{twinq_forward.1} parent=11 // pred_region
        _
      $region28: #{twinq_forward.1} parent=11 // pred_fallthru
        _
      // Predicated region
      $region29: #{twinq_forward.1} parent=11 // pred_check
        %p267 = pneg %p172
      $region30: #{twinq_forward.1} parent=11 // pred_check_branch
        %269 = sbr.rel (%p267) target = $region32
      $region31: #{twinq_forward.1} parent=11 // pred_region
        _
      $region32: #{twinq_forward.1} parent=11 // pred_fallthru
        _
      // Predicated region
      $region33: #{twinq_forward.1} parent=11 // pred_check
        %p270 = pneg %p193
      $region34: #{twinq_forward.1} parent=11 // pred_check_branch
        %272 = sbr.rel (%p270) target = $region36
      $region35: #{twinq_forward.1} parent=11 // pred_region
        _
      $region36: #{twinq_forward.1} parent=11 // pred_fallthru
        _
      // Predicated region
      $region37: #{twinq_forward.1} parent=11 // pred_check
        %p273 = pneg %p214
      $region38: #{twinq_forward.1} parent=11 // pred_check_branch
        %275 = sbr.rel (%p273) target = $region40
      $region39: #{twinq_forward.1} parent=11 // pred_region
        _
      $region40: #{twinq_forward.1} parent=11 // pred_fallthru
        _
    $region12: #{twinq_forward.1} parent=5 // pred_fallthru
      _
    %p276 = scmp.lt.s32.totalorder %s15, 4
    // Predicated region
    $region41: #{twinq_forward.1} parent=5 // pred_check
      %p277 = pneg %p276
    $region42: #{twinq_forward.1} parent=5 // pred_check_branch
      %279 = sbr.rel (%p277) target = $region44
    $region43: #{twinq_forward.1} parent=5 // pred_region
      // Predicated region
      $region45: #{twinq_forward.1} parent=43 // pred_check
        %p280 = pneg %p35
      $region46: #{twinq_forward.1} parent=43 // pred_check_branch
        %282 = sbr.rel (%p280) target = $region48
      $region47: #{twinq_forward.1} parent=43 // pred_region
        %s283 = smul.u32 16, %s15
        %p284 = scmp.lt.s32.totalorder %s283, 63
        %s285 = scalar_select %p284, %s283, 63
        %s286 = smul.addr %s285, 8
        %s287 = scalar_lea.vmem %s0, %s286
        %s288 = smul.u32 16, %s15
      $region48: #{twinq_forward.1} parent=43 // pred_fallthru
        _
      // Predicated region
      $region49: #{twinq_forward.1} parent=43 // pred_check
        %p289 = pneg %p61
      $region50: #{twinq_forward.1} parent=43 // pred_check_branch
        %291 = sbr.rel (%p289) target = $region52
      $region51: #{twinq_forward.1} parent=43 // pred_region
        %s292 = smul.u32 16, %s15
        %p293 = scmp.lt.s32.totalorder %s292, 63
        %s294 = scalar_select %p293, %s292, 63
        %s295 = smul.addr %s294, 8
        %s296 = scalar_lea.vmem %s1, %s295
        %s297 = smul.u32 16, %s15
      $region52: #{twinq_forward.1} parent=43 // pred_fallthru
        _
    $region44: #{twinq_forward.1} parent=5 // pred_fallthru
      _
    %p298 = scmp.le.s32.totalorder 1, %s15
    %p299 = scmp.lt.s32.totalorder %s15, 5
    %p300 = pnand %p298, %p299
    %p301 = pneg %p300
    // Predicated region
    $region53: #{twinq_forward.1} parent=5 // pred_check
      _
    $region54: #{twinq_forward.1} parent=5 // pred_check_branch
      %303 = sbr.rel (%p300) target = $region56
    $region55: #{twinq_forward.1} parent=5 // pred_region
      %s304 = ssub.s32 %s15, 1
      %s305 = smul.u32 16, %s20
      %p306 = scmp.lt.s32.totalorder %s305, 63
      %s307 = scalar_select %p306, %s305, 63
      %s308 = smul.addr %s307, 8
      %s309 = scalar_lea.vmem %s0, %s308
      %p310 = pneg %p41
      %p311 = pneg %p38
      %s312 = smul.u32 16, %s20
      %p313 = scmp.lt.s32.totalorder %s312, 63
      %s314 = scalar_select %p313, %s312, 63
      %s315 = smul.addr %s314, 8
      %s316 = scalar_lea.vmem %s1, %s315
      %p317 = pneg %p67
      %p318 = pneg %p64
      %p319 = pneg %p88
      %p320 = pneg %p85
      %p321 = pneg %p109
      %p322 = pneg %p106
      %p323 = pneg %p130
      %p324 = pneg %p127
      %p325 = pneg %p151
      %p326 = pneg %p148
      %p327 = pneg %p172
      %p328 = pneg %p169
      %p329 = pneg %p193
      %p330 = pneg %p190
      %p331 = pneg %p214
      %p332 = pneg %p211
      %p333 = pneg %p240
      %p334 = pneg %p237
      %p335 = scmp.lt.s32.totalorder %s20, 3
      %s336 = scalar_select %p335, %s20, 3
      %s337 = scalar_lea.vmem %s9, %s336
      %s338 = smul.u32 16, %s20
      %p339 = scmp.lt.s32.totalorder %s338, 63
      %s340 = scalar_select %p339, %s338, 63
      %s341 = smul.addr %s340, 8
      %s342 = scalar_lea.vmem %s0, %s341
      %s343 = smul.u32 16, %s20
      %s344 = smul.u32 16, %s20
      %p345 = scmp.lt.s32.totalorder %s344, 63
      %s346 = scalar_select %p345, %s344, 63
      %s347 = smul.addr %s346, 8
      %s348 = scalar_lea.vmem %s1, %s347
      %s349 = smul.u32 16, %s20
      %p350 = scmp.lt.s32.totalorder %s20, 3
      %s351 = scalar_select %p350, %s20, 3
      %s352 = scalar_lea.vmem %s9, %s351
      %v354 = vld [vmem:[%s342] sm:$0xff]
      %v355 = vld [vmem:[%s342 + $0x8] sm:$0xff]
      %v356 = vld [vmem:[%s342 + $0x10] sm:$0xff]
      %v357 = vld [vmem:[%s342 + $0x18] sm:$0xff]
      %v358 = vld [vmem:[%s342 + $0x20] sm:$0xff]
      %v359 = vld [vmem:[%s342 + $0x28] sm:$0xff]
      %v360 = vld [vmem:[%s342 + $0x30] sm:$0xff]
      %v361 = vld [vmem:[%s342 + $0x38] sm:$0xff]
      %v362 = vld [vmem:[%s342 + $0x40] sm:$0xff]
      %v363 = vld [vmem:[%s342 + $0x48] sm:$0xff]
      %v364 = vld [vmem:[%s342 + $0x50] sm:$0xff]
      %v365 = vld [vmem:[%s342 + $0x58] sm:$0xff]
      %v366 = vld [vmem:[%s342 + $0x60] sm:$0xff]
      %v367 = vld [vmem:[%s342 + $0x68] sm:$0xff]
      %v368 = vld [vmem:[%s342 + $0x70] sm:$0xff]
      %v369 = vld [vmem:[%s342 + $0x78] sm:$0xff]
      %v370 = vpack.c.bf16 %v355, %v354
      %v371 = vpack.c.bf16 %v357, %v356
      %v372 = vpack.c.bf16 %v359, %v358
      %v373 = vpack.c.bf16 %v361, %v360
      %v374 = vpack.c.bf16 %v363, %v362
      %v375 = vpack.c.bf16 %v365, %v364
      %v376 = vpack.c.bf16 %v367, %v366
      %v377 = vpack.c.bf16 %v369, %v368
      %v378 = vld [vmem:[%s2] sm:$0xff]
      %v379 = vld [vmem:[%s2 + $0x8] sm:$0xff]
      %v380 = vld [vmem:[%s348] sm:$0xff]
      %v381 = vld [vmem:[%s348 + $0x8] sm:$0xff]
      %v382 = vld [vmem:[%s348 + $0x10] sm:$0xff]
      %v383 = vld [vmem:[%s348 + $0x18] sm:$0xff]
      %v384 = vld [vmem:[%s348 + $0x20] sm:$0xff]
      %v385 = vld [vmem:[%s348 + $0x28] sm:$0xff]
      %v386 = vld [vmem:[%s348 + $0x30] sm:$0xff]
      %v387 = vld [vmem:[%s348 + $0x38] sm:$0xff]
      %v388 = vld [vmem:[%s348 + $0x40] sm:$0xff]
      %v389 = vld [vmem:[%s348 + $0x48] sm:$0xff]
      %v390 = vld [vmem:[%s348 + $0x50] sm:$0xff]
      %v391 = vld [vmem:[%s348 + $0x58] sm:$0xff]
      %v392 = vld [vmem:[%s348 + $0x60] sm:$0xff]
      %v393 = vld [vmem:[%s348 + $0x68] sm:$0xff]
      %v394 = vld [vmem:[%s348 + $0x70] sm:$0xff]
      %v395 = vld [vmem:[%s348 + $0x78] sm:$0xff]
      %v396 = vpack.c.bf16 %v381, %v380
      %v397 = vpack.c.bf16 %v383, %v382
      %v398 = vpack.c.bf16 %v385, %v384
      %v399 = vpack.c.bf16 %v387, %v386
      %v400 = vpack.c.bf16 %v389, %v388
      %v401 = vpack.c.bf16 %v391, %v390
      %v402 = vpack.c.bf16 %v393, %v392
      %v403 = vpack.c.bf16 %v395, %v394
      %v404 = vld [vmem:[%s3] sm:$0xff]
      %v406 = vunpack.c.l.b16 %v404
      %v407 = vunpack.c.h.b16 %v404
      %v408 = vpack.c.b16 %v406, %v406
      %v409 = vpack.c.b16 %v407, %v407
      %vm410 = vcmask 64512
      %v412 = vsel %vm410, %v396, 0
      %v415 = vsel %vm410, %v397, 0
      %v418 = vsel %vm410, %v398, 0
      %v421 = vsel %vm410, %v399, 0
      %v424 = vsel %vm410, %v400, 0
      %v427 = vsel %vm410, %v401, 0
      %v430 = vsel %vm410, %v402, 0
      %v433 = vsel %vm410, %v403, 0
      %vm435 = vcmask 1043456
      %v437 = vsel %vm435, %v408, 0
      %v440 = vsel %vm435, %v409, 0
      %442 = vmatprep.subr.bf16.mxu0 0
      %443 = vmatpush1.bf16.msra.mxu0 0
      %444 = vmatprep.subr.bf16.mxu0 0
      %445 = vmatpush1.bf16.msra.mxu0 0
      %446 = vmatprep.subr.bf16.mxu0 0
      %447 = vmatpush1.bf16.msra.mxu0 0
      %448 = vmatprep.subr.bf16.mxu0 0
      %449 = vmatpush1.bf16.msra.mxu0 0
      %450 = vmatprep.subr.bf16.mxu0 0
      %451 = vmatpush1.bf16.msra.mxu0 0
      %452 = vmatprep.subr.bf16.mxu0 0
      %453 = vmatpush1.bf16.msra.mxu0 0
      %454 = vmatprep.subr.bf16.mxu0 0
      %455 = vmatpush1.bf16.msra.mxu0 0
      %456 = vmatprep.subr.bf16.mxu0 %v440
      %457 = vmatpush1.bf16.msra.mxu0 %v437
      %458 = vmatprep.subr.bf16.mxu0 0
      %459 = vmatpush2.bf16.msra.mxu0 0
      %460 = vmatprep.subr.bf16.mxu0 0
      %461 = vmatpush2.bf16.msra.mxu0 0
      %462 = vmatprep.subr.bf16.mxu0 0
      %463 = vmatpush2.bf16.msra.mxu0 0
      %464 = vmatprep.subr.bf16.mxu0 0
      %465 = vmatpush2.bf16.msra.mxu0 0
      %466 = vmatprep.subr.bf16.mxu0 0
      %467 = vmatpush2.bf16.msra.mxu0 0
      %468 = vmatprep.subr.bf16.mxu0 0
      %469 = vmatpush2.bf16.msra.mxu0 0
      %470 = vmatprep.subr.bf16.mxu0 0
      %471 = vmatpush2.bf16.msra.mxu0 0
      %472 = vmatprep.subr.bf16.mxu0 0
      %473 = vmatpush2.bf16.msra.mxu0 0
      %474 = vmatprep.mubr.bf16.mxu0 0
      %475 = vmatmul.mubr.bf16.gmra.mxu0 %v412
      %v476 = vpop.f32.mrf.mxu0
      %v477 = vadd.f32 0.0, %v476
      %v478 = vpop.f32.mrf.mxu0
      %v479 = vadd.f32 0.0, %v478
      %v480 = vpop.f32.mrf.mxu0
      %v481 = vadd.f32 0.0, %v480
      %v482 = vpop.f32.mrf.mxu0
      %v483 = vadd.f32 0.0, %v482
      %484 = vmatprep.mubr.bf16.mxu0 0
      %485 = vmatmul.mubr.bf16.gmra.mxu0 %v415
      %v486 = vpop.f32.mrf.mxu0
      %v487 = vadd.f32 0.0, %v486
      %v488 = vpop.f32.mrf.mxu0
      %v489 = vadd.f32 0.0, %v488
      %v490 = vpop.f32.mrf.mxu0
      %v491 = vadd.f32 0.0, %v490
      %v492 = vpop.f32.mrf.mxu0
      %v493 = vadd.f32 0.0, %v492
      %494 = vmatprep.mubr.bf16.mxu0 0
      %495 = vmatmul.mubr.bf16.gmra.mxu0 %v418
      %v496 = vpop.f32.mrf.mxu0
      %v497 = vadd.f32 0.0, %v496
      %v498 = vpop.f32.mrf.mxu0
      %v499 = vadd.f32 0.0, %v498
      %v500 = vpop.f32.mrf.mxu0
      %v501 = vadd.f32 0.0, %v500
      %v502 = vpop.f32.mrf.mxu0
      %v503 = vadd.f32 0.0, %v502
      %504 = vmatprep.mubr.bf16.mxu0 0
      %505 = vmatmul.mubr.bf16.gmra.mxu0 %v421
      %v506 = vpop.f32.mrf.mxu0
      %v507 = vadd.f32 0.0, %v506
      %v508 = vpop.f32.mrf.mxu0
      %v509 = vadd.f32 0.0, %v508
      %v510 = vpop.f32.mrf.mxu0
      %v511 = vadd.f32 0.0, %v510
      %v512 = vpop.f32.mrf.mxu0
      %v513 = vadd.f32 0.0, %v512
      %514 = vmatprep.mubr.bf16.mxu0 0
      %515 = vmatmul.mubr.bf16.gmra.mxu0 %v424
      %v516 = vpop.f32.mrf.mxu0
      %v517 = vadd.f32 0.0, %v516
      %v518 = vpop.f32.mrf.mxu0
      %v519 = vadd.f32 0.0, %v518
      %v520 = vpop.f32.mrf.mxu0
      %v521 = vadd.f32 0.0, %v520
      %v522 = vpop.f32.mrf.mxu0
      %v523 = vadd.f32 0.0, %v522
      %524 = vmatprep.mubr.bf16.mxu0 0
      %525 = vmatmul.mubr.bf16.gmra.mxu0 %v427
      %v526 = vpop.f32.mrf.mxu0
      %v527 = vadd.f32 0.0, %v526
      %v528 = vpop.f32.mrf.mxu0
      %v529 = vadd.f32 0.0, %v528
      %v530 = vpop.f32.mrf.mxu0
      %v531 = vadd.f32 0.0, %v530
      %v532 = vpop.f32.mrf.mxu0
      %v533 = vadd.f32 0.0, %v532
      %534 = vmatprep.mubr.bf16.mxu0 0
      %535 = vmatmul.mubr.bf16.gmra.mxu0 %v430
      %v536 = vpop.f32.mrf.mxu0
      %v537 = vadd.f32 0.0, %v536
      %v538 = vpop.f32.mrf.mxu0
      %v539 = vadd.f32 0.0, %v538
      %v540 = vpop.f32.mrf.mxu0
      %v541 = vadd.f32 0.0, %v540
      %v542 = vpop.f32.mrf.mxu0
      %v543 = vadd.f32 0.0, %v542
      %544 = vmatprep.mubr.bf16.mxu0 0
      %545 = vmatmul.mubr.bf16.gmra.mxu0 %v433
      %v546 = vpop.f32.mrf.mxu0
      %v547 = vadd.f32 0.0, %v546
      %v548 = vpop.f32.mrf.mxu0
      %v549 = vadd.f32 0.0, %v548
      %v550 = vpop.f32.mrf.mxu0
      %v551 = vadd.f32 0.0, %v550
      %v552 = vpop.f32.mrf.mxu0
      %v553 = vadd.f32 0.0, %v552
      %554 = vdwg.mxu0
      %v557 = vunpack.c.l.b16 %v378
      %v558 = vunpack.c.h.b16 %v378
      %v559 = vunpack.c.l.b16 %v379
      %v560 = vunpack.c.h.b16 %v379
      %v561 = vpack.c.b16 %v559, %v557
      %v562 = vpack.c.b16 %v560, %v558
      %vm565 = vcmask 130048
      %v567 = vsel %vm565, %v370, 0
      %v570 = vsel %vm565, %v371, 0
      %v573 = vsel %vm565, %v372, 0
      %v576 = vsel %vm565, %v373, 0
      %v579 = vsel %vm565, %v374, 0
      %v582 = vsel %vm565, %v375, 0
      %v585 = vsel %vm565, %v376, 0
      %v588 = vsel %vm565, %v377, 0
      %590 = vmatprep.subr.bf16.mxu0 0
      %591 = vmatpush1.bf16.msra.mxu0 0
      %592 = vmatprep.subr.bf16.mxu0 0
      %593 = vmatpush1.bf16.msra.mxu0 0
      %594 = vmatprep.subr.bf16.mxu0 0
      %595 = vmatpush1.bf16.msra.mxu0 0
      %596 = vmatprep.subr.bf16.mxu0 0
      %597 = vmatpush1.bf16.msra.mxu0 0
      %598 = vmatprep.subr.bf16.mxu0 0
      %599 = vmatpush1.bf16.msra.mxu0 0
      %600 = vmatprep.subr.bf16.mxu0 0
      %601 = vmatpush1.bf16.msra.mxu0 0
      %602 = vmatprep.subr.bf16.mxu0 0
      %603 = vmatpush1.bf16.msra.mxu0 0
      %604 = vmatprep.subr.bf16.mxu0 %v562
      %605 = vmatpush1.bf16.msra.mxu0 %v561
      %606 = vmatprep.subr.bf16.mxu0 0
      %607 = vmatpush2.bf16.msra.mxu0 0
      %608 = vmatprep.subr.bf16.mxu0 0
      %609 = vmatpush2.bf16.msra.mxu0 0
      %610 = vmatprep.subr.bf16.mxu0 0
      %611 = vmatpush2.bf16.msra.mxu0 0
      %612 = vmatprep.subr.bf16.mxu0 0
      %613 = vmatpush2.bf16.msra.mxu0 0
      %614 = vmatprep.subr.bf16.mxu0 0
      %615 = vmatpush2.bf16.msra.mxu0 0
      %616 = vmatprep.subr.bf16.mxu0 0
      %617 = vmatpush2.bf16.msra.mxu0 0
      %618 = vmatprep.subr.bf16.mxu0 0
      %619 = vmatpush2.bf16.msra.mxu0 0
      %620 = vmatprep.subr.bf16.mxu0 0
      %621 = vmatpush2.bf16.msra.mxu0 0
      %622 = vmatprep.mubr.bf16.mxu0 0
      %623 = vmatmul.mubr.bf16.gmra.mxu0 %v567
      %v624 = vpop.f32.mrf.mxu0
      %v625 = vadd.f32 %v477, %v624
      %v626 = vpop.f32.mrf.mxu0
      %v627 = vadd.f32 %v479, %v626
      %v628 = vpop.f32.mrf.mxu0
      %v629 = vadd.f32 %v481, %v628
      %v630 = vpop.f32.mrf.mxu0
      %v631 = vadd.f32 %v483, %v630
      %632 = vmatprep.mubr.bf16.mxu0 0
      %633 = vmatmul.mubr.bf16.gmra.mxu0 %v570
      %v634 = vpop.f32.mrf.mxu0
      %v635 = vadd.f32 %v487, %v634
      %v636 = vpop.f32.mrf.mxu0
      %v637 = vadd.f32 %v489, %v636
      %v638 = vpop.f32.mrf.mxu0
      %v639 = vadd.f32 %v491, %v638
      %v640 = vpop.f32.mrf.mxu0
      %v641 = vadd.f32 %v493, %v640
      %642 = vmatprep.mubr.bf16.mxu0 0
      %643 = vmatmul.mubr.bf16.gmra.mxu0 %v573
      %v644 = vpop.f32.mrf.mxu0
      %v645 = vadd.f32 %v497, %v644
      %v646 = vpop.f32.mrf.mxu0
      %v647 = vadd.f32 %v499, %v646
      %v648 = vpop.f32.mrf.mxu0
      %v649 = vadd.f32 %v501, %v648
      %v650 = vpop.f32.mrf.mxu0
      %v651 = vadd.f32 %v503, %v650
      %652 = vmatprep.mubr.bf16.mxu0 0
      %653 = vmatmul.mubr.bf16.gmra.mxu0 %v576
      %v654 = vpop.f32.mrf.mxu0
      %v655 = vadd.f32 %v507, %v654
      %v656 = vpop.f32.mrf.mxu0
      %v657 = vadd.f32 %v509, %v656
      %v658 = vpop.f32.mrf.mxu0
      %v659 = vadd.f32 %v511, %v658
      %v660 = vpop.f32.mrf.mxu0
      %v661 = vadd.f32 %v513, %v660
      %662 = vmatprep.mubr.bf16.mxu0 0
      %663 = vmatmul.mubr.bf16.gmra.mxu0 %v579
      %v664 = vpop.f32.mrf.mxu0
      %v665 = vadd.f32 %v517, %v664
      %v666 = vpop.f32.mrf.mxu0
      %v667 = vadd.f32 %v519, %v666
      %v668 = vpop.f32.mrf.mxu0
      %v669 = vadd.f32 %v521, %v668
      %v670 = vpop.f32.mrf.mxu0
      %v671 = vadd.f32 %v523, %v670
      %672 = vmatprep.mubr.bf16.mxu0 0
      %673 = vmatmul.mubr.bf16.gmra.mxu0 %v582
      %v674 = vpop.f32.mrf.mxu0
      %v675 = vadd.f32 %v527, %v674
      %v676 = vpop.f32.mrf.mxu0
      %v677 = vadd.f32 %v529, %v676
      %v678 = vpop.f32.mrf.mxu0
      %v679 = vadd.f32 %v531, %v678
      %v680 = vpop.f32.mrf.mxu0
      %v681 = vadd.f32 %v533, %v680
      %682 = vmatprep.mubr.bf16.mxu0 0
      %683 = vmatmul.mubr.bf16.gmra.mxu0 %v585
      %v684 = vpop.f32.mrf.mxu0
      %v685 = vadd.f32 %v537, %v684
      %v686 = vpop.f32.mrf.mxu0
      %v687 = vadd.f32 %v539, %v686
      %v688 = vpop.f32.mrf.mxu0
      %v689 = vadd.f32 %v541, %v688
      %v690 = vpop.f32.mrf.mxu0
      %v691 = vadd.f32 %v543, %v690
      %692 = vmatprep.mubr.bf16.mxu0 0
      %693 = vmatmul.mubr.bf16.gmra.mxu0 %v588
      %v694 = vpop.f32.mrf.mxu0
      %v695 = vadd.f32 %v547, %v694
      %v696 = vpop.f32.mrf.mxu0
      %v697 = vadd.f32 %v549, %v696
      %v698 = vpop.f32.mrf.mxu0
      %v699 = vadd.f32 %v551, %v698
      %v700 = vpop.f32.mrf.mxu0
      %v701 = vadd.f32 %v553, %v700
      %702 = vdwg.mxu0
      %v703 = vld [vmem:[%s4] sm:$0x3]
      %v705 = vlaneseq
      %v706 = vshrl.u32 %v705, 7
      %v707 = vsub.s32 0, %v706
      %v708 = vrot.slane %v703, %v707
      %v709 = vlaneseq
      %v710 = vshrl.u32 %v709, 7
      %v711 = vsub.s32 1, %v710
      %v712 = vrot.slane %v703, %v711
      %v715 = vadd.f32 %v625, %v708
      %v716 = vadd.f32 %v627, %v712
      %v717 = vadd.f32 %v629, %v708
      %v718 = vadd.f32 %v631, %v712
      %v719 = vadd.f32 %v635, %v708
      %v720 = vadd.f32 %v637, %v712
      %v721 = vadd.f32 %v639, %v708
      %v722 = vadd.f32 %v641, %v712
      %v723 = vadd.f32 %v645, %v708
      %v724 = vadd.f32 %v647, %v712
      %v725 = vadd.f32 %v649, %v708
      %v726 = vadd.f32 %v651, %v712
      %v727 = vadd.f32 %v655, %v708
      %v728 = vadd.f32 %v657, %v712
      %v729 = vadd.f32 %v659, %v708
      %v730 = vadd.f32 %v661, %v712
      %v731 = vadd.f32 %v665, %v708
      %v732 = vadd.f32 %v667, %v712
      %v733 = vadd.f32 %v669, %v708
      %v734 = vadd.f32 %v671, %v712
      %v735 = vadd.f32 %v675, %v708
      %v736 = vadd.f32 %v677, %v712
      %v737 = vadd.f32 %v679, %v708
      %v738 = vadd.f32 %v681, %v712
      %v739 = vadd.f32 %v685, %v708
      %v740 = vadd.f32 %v687, %v712
      %v741 = vadd.f32 %v689, %v708
      %v742 = vadd.f32 %v691, %v712
      %v743 = vadd.f32 %v695, %v708
      %v744 = vadd.f32 %v697, %v712
      %v745 = vadd.f32 %v699, %v708
      %v746 = vadd.f32 %v701, %v712
      %v747 = vmax.f32 %v715, 0.0
      %v748 = vmax.f32 %v716, 0.0
      %v749 = vmax.f32 %v717, 0.0
      %v750 = vmax.f32 %v718, 0.0
      %v751 = vmax.f32 %v719, 0.0
      %v752 = vmax.f32 %v720, 0.0
      %v753 = vmax.f32 %v721, 0.0
      %v754 = vmax.f32 %v722, 0.0
      %v755 = vmax.f32 %v723, 0.0
      %v756 = vmax.f32 %v724, 0.0
      %v757 = vmax.f32 %v725, 0.0
      %v758 = vmax.f32 %v726, 0.0
      %v759 = vmax.f32 %v727, 0.0
      %v760 = vmax.f32 %v728, 0.0
      %v761 = vmax.f32 %v729, 0.0
      %v762 = vmax.f32 %v730, 0.0
      %v763 = vmax.f32 %v731, 0.0
      %v764 = vmax.f32 %v732, 0.0
      %v765 = vmax.f32 %v733, 0.0
      %v766 = vmax.f32 %v734, 0.0
      %v767 = vmax.f32 %v735, 0.0
      %v768 = vmax.f32 %v736, 0.0
      %v769 = vmax.f32 %v737, 0.0
      %v770 = vmax.f32 %v738, 0.0
      %v771 = vmax.f32 %v739, 0.0
      %v772 = vmax.f32 %v740, 0.0
      %v773 = vmax.f32 %v741, 0.0
      %v774 = vmax.f32 %v742, 0.0
      %v775 = vmax.f32 %v743, 0.0
      %v776 = vmax.f32 %v744, 0.0
      %v777 = vmax.f32 %v745, 0.0
      %v778 = vmax.f32 %v746, 0.0
      %v779 = vpack.c.bf16 %v749, %v747
      %v780 = vpack.c.bf16 %v750, %v748
      %v781 = vpack.c.bf16 %v753, %v751
      %v782 = vpack.c.bf16 %v754, %v752
      %v783 = vpack.c.bf16 %v757, %v755
      %v784 = vpack.c.bf16 %v758, %v756
      %v785 = vpack.c.bf16 %v761, %v759
      %v786 = vpack.c.bf16 %v762, %v760
      %v787 = vpack.c.bf16 %v765, %v763
      %v788 = vpack.c.bf16 %v766, %v764
      %v789 = vpack.c.bf16 %v769, %v767
      %v790 = vpack.c.bf16 %v770, %v768
      %v791 = vpack.c.bf16 %v773, %v771
      %v792 = vpack.c.bf16 %v774, %v772
      %v793 = vpack.c.bf16 %v777, %v775
      %v794 = vpack.c.bf16 %v778, %v776
      %v795 = vld [vmem:[%s5] sm:$0xff]
      %v796 = vld [vmem:[%s5 + $0x8] sm:$0xff]
      %v797 = vld [vmem:[%s5 + $0x10] sm:$0xff]
      %v798 = vld [vmem:[%s5 + $0x18] sm:$0xff]
      %v799 = vld [vmem:[%s5 + $0x20] sm:$0xff]
      %v800 = vld [vmem:[%s5 + $0x28] sm:$0xff]
      %v801 = vld [vmem:[%s5 + $0x30] sm:$0xff]
      %v802 = vld [vmem:[%s5 + $0x38] sm:$0xff]
      %v803 = vld [vmem:[%s5 + $0x40] sm:$0xff]
      %v804 = vld [vmem:[%s5 + $0x48] sm:$0xff]
      %v805 = vld [vmem:[%s5 + $0x50] sm:$0xff]
      %v806 = vld [vmem:[%s5 + $0x58] sm:$0xff]
      %v807 = vld [vmem:[%s5 + $0x60] sm:$0xff]
      %v808 = vld [vmem:[%s5 + $0x68] sm:$0xff]
      %v809 = vld [vmem:[%s5 + $0x70] sm:$0xff]
      %v810 = vld [vmem:[%s5 + $0x78] sm:$0xff]
      %v811 = vld [vmem:[%s5 + $0x80] sm:$0xff]
      %v812 = vld [vmem:[%s5 + $0x88] sm:$0xff]
      %v813 = vld [vmem:[%s5 + $0x90] sm:$0xff]
      %v814 = vld [vmem:[%s5 + $0x98] sm:$0xff]
      %v815 = vld [vmem:[%s5 + $0xa0] sm:$0xff]
      %v816 = vld [vmem:[%s5 + $0xa8] sm:$0xff]
      %v817 = vld [vmem:[%s5 + $0xb0] sm:$0xff]
      %v818 = vld [vmem:[%s5 + $0xb8] sm:$0xff]
      %v819 = vld [vmem:[%s5 + $0xc0] sm:$0xff]
      %v820 = vld [vmem:[%s5 + $0xc8] sm:$0xff]
      %v821 = vld [vmem:[%s5 + $0xd0] sm:$0xff]
      %v822 = vld [vmem:[%s5 + $0xd8] sm:$0xff]
      %v823 = vld [vmem:[%s5 + $0xe0] sm:$0xff]
      %v824 = vld [vmem:[%s5 + $0xe8] sm:$0xff]
      %v825 = vld [vmem:[%s5 + $0xf0] sm:$0xff]
      %v826 = vld [vmem:[%s5 + $0xf8] sm:$0xff]
      %v827 = vld [vmem:[%s6] sm:$0x3]
      %v829 = vlaneseq
      %v830 = vshrl.u32 %v829, 7
      %v831 = vsub.s32 0, %v830
      %v832 = vrot.slane %v827, %v831
      %v833 = vlaneseq
      %v834 = vshrl.u32 %v833, 7
      %v835 = vsub.s32 1, %v834
      %v836 = vrot.slane %v827, %v835
      %v871 = vunpack.c.l.b16 %v795
      %v872 = vunpack.c.h.b16 %v795
      %v873 = vunpack.c.l.b16 %v796
      %v874 = vunpack.c.h.b16 %v796
      %v875 = vunpack.c.l.b16 %v797
      %v876 = vunpack.c.h.b16 %v797
      %v877 = vunpack.c.l.b16 %v798
      %v878 = vunpack.c.h.b16 %v798
      %v879 = vunpack.c.l.b16 %v799
      %v880 = vunpack.c.h.b16 %v799
      %v881 = vunpack.c.l.b16 %v800
      %v882 = vunpack.c.h.b16 %v800
      %v883 = vunpack.c.l.b16 %v801
      %v884 = vunpack.c.h.b16 %v801
      %v885 = vunpack.c.l.b16 %v802
      %v886 = vunpack.c.h.b16 %v802
      %v887 = vunpack.c.l.b16 %v803
      %v888 = vunpack.c.h.b16 %v803
      %v889 = vunpack.c.l.b16 %v804
      %v890 = vunpack.c.h.b16 %v804
      %v891 = vunpack.c.l.b16 %v805
      %v892 = vunpack.c.h.b16 %v805
      %v893 = vunpack.c.l.b16 %v806
      %v894 = vunpack.c.h.b16 %v806
      %v895 = vunpack.c.l.b16 %v807
      %v896 = vunpack.c.h.b16 %v807
      %v897 = vunpack.c.l.b16 %v808
      %v898 = vunpack.c.h.b16 %v808
      %v899 = vunpack.c.l.b16 %v809
      %v900 = vunpack.c.h.b16 %v809
      %v901 = vunpack.c.l.b16 %v810
      %v902 = vunpack.c.h.b16 %v810
      %v903 = vunpack.c.l.b16 %v811
      %v904 = vunpack.c.h.b16 %v811
      %v905 = vunpack.c.l.b16 %v812
      %v906 = vunpack.c.h.b16 %v812
      %v907 = vunpack.c.l.b16 %v813
      %v908 = vunpack.c.h.b16 %v813
      %v909 = vunpack.c.l.b16 %v814
      %v910 = vunpack.c.h.b16 %v814
      %v911 = vunpack.c.l.b16 %v815
      %v912 = vunpack.c.h.b16 %v815
      %v913 = vunpack.c.l.b16 %v816
      %v914 = vunpack.c.h.b16 %v816
      %v915 = vunpack.c.l.b16 %v817
      %v916 = vunpack.c.h.b16 %v817
      %v917 = vunpack.c.l.b16 %v818
      %v918 = vunpack.c.h.b16 %v818
      %v919 = vunpack.c.l.b16 %v819
      %v920 = vunpack.c.h.b16 %v819
      %v921 = vunpack.c.l.b16 %v820
      %v922 = vunpack.c.h.b16 %v820
      %v923 = vunpack.c.l.b16 %v821
      %v924 = vunpack.c.h.b16 %v821
      %v925 = vunpack.c.l.b16 %v822
      %v926 = vunpack.c.h.b16 %v822
      %v927 = vunpack.c.l.b16 %v823
      %v928 = vunpack.c.h.b16 %v823
      %v929 = vunpack.c.l.b16 %v824
      %v930 = vunpack.c.h.b16 %v824
      %v931 = vunpack.c.l.b16 %v825
      %v932 = vunpack.c.h.b16 %v825
      %v933 = vunpack.c.l.b16 %v826
      %v934 = vunpack.c.h.b16 %v826
      %v935 = vpack.c.b16 %v873, %v871
      %v936 = vpack.c.b16 %v874, %v872
      %v937 = vpack.c.b16 %v877, %v875
      %v938 = vpack.c.b16 %v878, %v876
      %v939 = vpack.c.b16 %v881, %v879
      %v940 = vpack.c.b16 %v882, %v880
      %v941 = vpack.c.b16 %v885, %v883
      %v942 = vpack.c.b16 %v886, %v884
      %v943 = vpack.c.b16 %v889, %v887
      %v944 = vpack.c.b16 %v890, %v888
      %v945 = vpack.c.b16 %v893, %v891
      %v946 = vpack.c.b16 %v894, %v892
      %v947 = vpack.c.b16 %v897, %v895
      %v948 = vpack.c.b16 %v898, %v896
      %v949 = vpack.c.b16 %v901, %v899
      %v950 = vpack.c.b16 %v902, %v900
      %v951 = vpack.c.b16 %v905, %v903
      %v952 = vpack.c.b16 %v906, %v904
      %v953 = vpack.c.b16 %v909, %v907
      %v954 = vpack.c.b16 %v910, %v908
      %v955 = vpack.c.b16 %v913, %v911
      %v956 = vpack.c.b16 %v914, %v912
      %v957 = vpack.c.b16 %v917, %v915
      %v958 = vpack.c.b16 %v918, %v916
      %v959 = vpack.c.b16 %v921, %v919
      %v960 = vpack.c.b16 %v922, %v920
      %v961 = vpack.c.b16 %v925, %v923
      %v962 = vpack.c.b16 %v926, %v924
      %v963 = vpack.c.b16 %v929, %v927
      %v964 = vpack.c.b16 %v930, %v928
      %v965 = vpack.c.b16 %v933, %v931
      %v966 = vpack.c.b16 %v934, %v932
      %999 = vmatprep.subr.bf16.mxu0 %v950
      %1000 = vmatpush1.bf16.msra.mxu0 %v949
      %1001 = vmatprep.subr.bf16.mxu0 %v948
      %1002 = vmatpush1.bf16.msra.mxu0 %v947
      %1003 = vmatprep.subr.bf16.mxu0 %v946
      %1004 = vmatpush1.bf16.msra.mxu0 %v945
      %1005 = vmatprep.subr.bf16.mxu0 %v944
      %1006 = vmatpush1.bf16.msra.mxu0 %v943
      %1007 = vmatprep.subr.bf16.mxu0 %v942
      %1008 = vmatpush1.bf16.msra.mxu0 %v941
      %1009 = vmatprep.subr.bf16.mxu0 %v940
      %1010 = vmatpush1.bf16.msra.mxu0 %v939
      %1011 = vmatprep.subr.bf16.mxu0 %v938
      %1012 = vmatpush1.bf16.msra.mxu0 %v937
      %1013 = vmatprep.subr.bf16.mxu0 %v936
      %1014 = vmatpush1.bf16.msra.mxu0 %v935
      %1015 = vmatprep.subr.bf16.mxu0 %v966
      %1016 = vmatpush2.bf16.msra.mxu0 %v965
      %1017 = vmatprep.subr.bf16.mxu0 %v964
      %1018 = vmatpush2.bf16.msra.mxu0 %v963
      %1019 = vmatprep.subr.bf16.mxu0 %v962
      %1020 = vmatpush2.bf16.msra.mxu0 %v961
      %1021 = vmatprep.subr.bf16.mxu0 %v960
      %1022 = vmatpush2.bf16.msra.mxu0 %v959
      %1023 = vmatprep.subr.bf16.mxu0 %v958
      %1024 = vmatpush2.bf16.msra.mxu0 %v957
      %1025 = vmatprep.subr.bf16.mxu0 %v956
      %1026 = vmatpush2.bf16.msra.mxu0 %v955
      %1027 = vmatprep.subr.bf16.mxu0 %v954
      %1028 = vmatpush2.bf16.msra.mxu0 %v953
      %1029 = vmatprep.subr.bf16.mxu0 %v952
      %1030 = vmatpush2.bf16.msra.mxu0 %v951
      %1031 = vmatprep.mubr.bf16.mxu0 %v780
      %1032 = vmatmul.mubr.bf16.gmra.mxu0 %v779
      %v1033 = vpop.f32.mrf.mxu0
      %v1034 = vadd.f32 %v832, %v1033
      %v1035 = vpop.f32.mrf.mxu0
      %v1036 = vadd.f32 %v836, %v1035
      %v1037 = vpop.f32.mrf.mxu0
      %v1038 = vadd.f32 %v832, %v1037
      %v1039 = vpop.f32.mrf.mxu0
      %v1040 = vadd.f32 %v836, %v1039
      %1041 = vmatprep.mubr.bf16.mxu0 %v782
      %1042 = vmatmul.mubr.bf16.gmra.mxu0 %v781
      %v1043 = vpop.f32.mrf.mxu0
      %v1044 = vadd.f32 %v832, %v1043
      %v1045 = vpop.f32.mrf.mxu0
      %v1046 = vadd.f32 %v836, %v1045
      %v1047 = vpop.f32.mrf.mxu0
      %v1048 = vadd.f32 %v832, %v1047
      %v1049 = vpop.f32.mrf.mxu0
      %v1050 = vadd.f32 %v836, %v1049
      %1051 = vmatprep.mubr.bf16.mxu0 %v784
      %1052 = vmatmul.mubr.bf16.gmra.mxu0 %v783
      %v1053 = vpop.f32.mrf.mxu0
      %v1054 = vadd.f32 %v832, %v1053
      %v1055 = vpop.f32.mrf.mxu0
      %v1056 = vadd.f32 %v836, %v1055
      %v1057 = vpop.f32.mrf.mxu0
      %v1058 = vadd.f32 %v832, %v1057
      %v1059 = vpop.f32.mrf.mxu0
      %v1060 = vadd.f32 %v836, %v1059
      %1061 = vmatprep.mubr.bf16.mxu0 %v786
      %1062 = vmatmul.mubr.bf16.gmra.mxu0 %v785
      %v1063 = vpop.f32.mrf.mxu0
      %v1064 = vadd.f32 %v832, %v1063
      %v1065 = vpop.f32.mrf.mxu0
      %v1066 = vadd.f32 %v836, %v1065
      %v1067 = vpop.f32.mrf.mxu0
      %v1068 = vadd.f32 %v832, %v1067
      %v1069 = vpop.f32.mrf.mxu0
      %v1070 = vadd.f32 %v836, %v1069
      %1071 = vmatprep.mubr.bf16.mxu0 %v788
      %1072 = vmatmul.mubr.bf16.gmra.mxu0 %v787
      %v1073 = vpop.f32.mrf.mxu0
      %v1074 = vadd.f32 %v832, %v1073
      %v1075 = vpop.f32.mrf.mxu0
      %v1076 = vadd.f32 %v836, %v1075
      %v1077 = vpop.f32.mrf.mxu0
      %v1078 = vadd.f32 %v832, %v1077
      %v1079 = vpop.f32.mrf.mxu0
      %v1080 = vadd.f32 %v836, %v1079
      %1081 = vmatprep.mubr.bf16.mxu0 %v790
      %1082 = vmatmul.mubr.bf16.gmra.mxu0 %v789
      %v1083 = vpop.f32.mrf.mxu0
      %v1084 = vadd.f32 %v832, %v1083
      %v1085 = vpop.f32.mrf.mxu0
      %v1086 = vadd.f32 %v836, %v1085
      %v1087 = vpop.f32.mrf.mxu0
      %v1088 = vadd.f32 %v832, %v1087
      %v1089 = vpop.f32.mrf.mxu0
      %v1090 = vadd.f32 %v836, %v1089
      %1091 = vmatprep.mubr.bf16.mxu0 %v792
      %1092 = vmatmul.mubr.bf16.gmra.mxu0 %v791
      %v1093 = vpop.f32.mrf.mxu0
      %v1094 = vadd.f32 %v832, %v1093
      %v1095 = vpop.f32.mrf.mxu0
      %v1096 = vadd.f32 %v836, %v1095
      %v1097 = vpop.f32.mrf.mxu0
      %v1098 = vadd.f32 %v832, %v1097
      %v1099 = vpop.f32.mrf.mxu0
      %v1100 = vadd.f32 %v836, %v1099
      %1101 = vmatprep.mubr.bf16.mxu0 %v794
      %1102 = vmatmul.mubr.bf16.gmra.mxu0 %v793
      %v1103 = vpop.f32.mrf.mxu0
      %v1104 = vadd.f32 %v832, %v1103
      %v1105 = vpop.f32.mrf.mxu0
      %v1106 = vadd.f32 %v836, %v1105
      %v1107 = vpop.f32.mrf.mxu0
      %v1108 = vadd.f32 %v832, %v1107
      %v1109 = vpop.f32.mrf.mxu0
      %v1110 = vadd.f32 %v836, %v1109
      %1111 = vdwg.mxu0
      %v1112 = vmax.f32 %v1034, 0.0
      %v1113 = vmax.f32 %v1036, 0.0
      %v1114 = vmax.f32 %v1038, 0.0
      %v1115 = vmax.f32 %v1040, 0.0
      %v1116 = vmax.f32 %v1044, 0.0
      %v1117 = vmax.f32 %v1046, 0.0
      %v1118 = vmax.f32 %v1048, 0.0
      %v1119 = vmax.f32 %v1050, 0.0
      %v1120 = vmax.f32 %v1054, 0.0
      %v1121 = vmax.f32 %v1056, 0.0
      %v1122 = vmax.f32 %v1058, 0.0
      %v1123 = vmax.f32 %v1060, 0.0
      %v1124 = vmax.f32 %v1064, 0.0
      %v1125 = vmax.f32 %v1066, 0.0
      %v1126 = vmax.f32 %v1068, 0.0
      %v1127 = vmax.f32 %v1070, 0.0
      %v1128 = vmax.f32 %v1074, 0.0
      %v1129 = vmax.f32 %v1076, 0.0
      %v1130 = vmax.f32 %v1078, 0.0
      %v1131 = vmax.f32 %v1080, 0.0
      %v1132 = vmax.f32 %v1084, 0.0
      %v1133 = vmax.f32 %v1086, 0.0
      %v1134 = vmax.f32 %v1088, 0.0
      %v1135 = vmax.f32 %v1090, 0.0
      %v1136 = vmax.f32 %v1094, 0.0
      %v1137 = vmax.f32 %v1096, 0.0
      %v1138 = vmax.f32 %v1098, 0.0
      %v1139 = vmax.f32 %v1100, 0.0
      %v1140 = vmax.f32 %v1104, 0.0
      %v1141 = vmax.f32 %v1106, 0.0
      %v1142 = vmax.f32 %v1108, 0.0
      %v1143 = vmax.f32 %v1110, 0.0
      %v1144 = vpack.c.bf16 %v1114, %v1112
      %v1145 = vpack.c.bf16 %v1115, %v1113
      %v1146 = vpack.c.bf16 %v1118, %v1116
      %v1147 = vpack.c.bf16 %v1119, %v1117
      %v1148 = vpack.c.bf16 %v1122, %v1120
      %v1149 = vpack.c.bf16 %v1123, %v1121
      %v1150 = vpack.c.bf16 %v1126, %v1124
      %v1151 = vpack.c.bf16 %v1127, %v1125
      %v1152 = vpack.c.bf16 %v1130, %v1128
      %v1153 = vpack.c.bf16 %v1131, %v1129
      %v1154 = vpack.c.bf16 %v1134, %v1132
      %v1155 = vpack.c.bf16 %v1135, %v1133
      %v1156 = vpack.c.bf16 %v1138, %v1136
      %v1157 = vpack.c.bf16 %v1139, %v1137
      %v1158 = vpack.c.bf16 %v1142, %v1140
      %v1159 = vpack.c.bf16 %v1143, %v1141
      %v1160 = vld [vmem:[%s7] sm:$0xf]
      %v1161 = vld [vmem:[%s7 + $0x4] sm:$0xf]
      %v1162 = vld [vmem:[%s7 + $0x8] sm:$0xf]
      %v1163 = vld [vmem:[%s7 + $0xc] sm:$0xf]
      %v1164 = vld [vmem:[%s7 + $0x10] sm:$0xf]
      %v1165 = vld [vmem:[%s7 + $0x14] sm:$0xf]
      %v1166 = vld [vmem:[%s7 + $0x18] sm:$0xf]
      %v1167 = vld [vmem:[%s7 + $0x1c] sm:$0xf]
      %v1168 = vld [vmem:[%s7 + $0x20] sm:$0xf]
      %v1169 = vld [vmem:[%s7 + $0x24] sm:$0xf]
      %v1170 = vld [vmem:[%s7 + $0x28] sm:$0xf]
      %v1171 = vld [vmem:[%s7 + $0x2c] sm:$0xf]
      %v1172 = vld [vmem:[%s7 + $0x30] sm:$0xf]
      %v1173 = vld [vmem:[%s7 + $0x34] sm:$0xf]
      %v1174 = vld [vmem:[%s7 + $0x38] sm:$0xf]
      %v1175 = vld [vmem:[%s7 + $0x3c] sm:$0xf]
      %v1176 = vld [vmem:[%s7 + $0x40] sm:$0xf]
      %v1177 = vld [vmem:[%s7 + $0x44] sm:$0xf]
      %v1178 = vld [vmem:[%s7 + $0x48] sm:$0xf]
      %v1179 = vld [vmem:[%s7 + $0x4c] sm:$0xf]
      %v1180 = vld [vmem:[%s7 + $0x50] sm:$0xf]
      %v1181 = vld [vmem:[%s7 + $0x54] sm:$0xf]
      %v1182 = vld [vmem:[%s7 + $0x58] sm:$0xf]
      %v1183 = vld [vmem:[%s7 + $0x5c] sm:$0xf]
      %v1184 = vld [vmem:[%s7 + $0x60] sm:$0xf]
      %v1185 = vld [vmem:[%s7 + $0x64] sm:$0xf]
      %v1186 = vld [vmem:[%s7 + $0x68] sm:$0xf]
      %v1187 = vld [vmem:[%s7 + $0x6c] sm:$0xf]
      %v1188 = vld [vmem:[%s7 + $0x70] sm:$0xf]
      %v1189 = vld [vmem:[%s7 + $0x74] sm:$0xf]
      %v1190 = vld [vmem:[%s7 + $0x78] sm:$0xf]
      %v1191 = vld [vmem:[%s7 + $0x7c] sm:$0xf]
      %v1192 = vld [vmem:[%s8] sm:$0x1]
      %v1194 = vlaneseq
      %v1195 = vshrl.u32 %v1194, 7
      %v1196 = vsub.s32 0, %v1195
      %v1197 = vrot.slane %v1192, %v1196
      %v1231 = vunpack.c.l.b16 %v1160
      %v1232 = vunpack.c.l.b16 %v1161
      %v1233 = vunpack.c.l.b16 %v1162
      %v1234 = vunpack.c.l.b16 %v1163
      %v1235 = vunpack.c.l.b16 %v1164
      %v1236 = vunpack.c.l.b16 %v1165
      %v1237 = vunpack.c.l.b16 %v1166
      %v1238 = vunpack.c.l.b16 %v1167
      %v1239 = vunpack.c.l.b16 %v1168
      %v1240 = vunpack.c.l.b16 %v1169
      %v1241 = vunpack.c.l.b16 %v1170
      %v1242 = vunpack.c.l.b16 %v1171
      %v1243 = vunpack.c.l.b16 %v1172
      %v1244 = vunpack.c.l.b16 %v1173
      %v1245 = vunpack.c.l.b16 %v1174
      %v1246 = vunpack.c.l.b16 %v1175
      %v1247 = vunpack.c.l.b16 %v1176
      %v1248 = vunpack.c.l.b16 %v1177
      %v1249 = vunpack.c.l.b16 %v1178
      %v1250 = vunpack.c.l.b16 %v1179
      %v1251 = vunpack.c.l.b16 %v1180
      %v1252 = vunpack.c.l.b16 %v1181
      %v1253 = vunpack.c.l.b16 %v1182
      %v1254 = vunpack.c.l.b16 %v1183
      %v1255 = vunpack.c.l.b16 %v1184
      %v1256 = vunpack.c.l.b16 %v1185
      %v1257 = vunpack.c.l.b16 %v1186
      %v1258 = vunpack.c.l.b16 %v1187
      %v1259 = vunpack.c.l.b16 %v1188
      %v1260 = vunpack.c.l.b16 %v1189
      %v1261 = vunpack.c.l.b16 %v1190
      %v1262 = vunpack.c.l.b16 %v1191
      %v1263 = vpack.c.b16 %v1232, %v1231
      %v1264 = vpack.c.b16 %v1234, %v1233
      %v1265 = vpack.c.b16 %v1236, %v1235
      %v1266 = vpack.c.b16 %v1238, %v1237
      %v1267 = vpack.c.b16 %v1240, %v1239
      %v1268 = vpack.c.b16 %v1242, %v1241
      %v1269 = vpack.c.b16 %v1244, %v1243
      %v1270 = vpack.c.b16 %v1246, %v1245
      %v1271 = vpack.c.b16 %v1248, %v1247
      %v1272 = vpack.c.b16 %v1250, %v1249
      %v1273 = vpack.c.b16 %v1252, %v1251
      %v1274 = vpack.c.b16 %v1254, %v1253
      %v1275 = vpack.c.b16 %v1256, %v1255
      %v1276 = vpack.c.b16 %v1258, %v1257
      %v1277 = vpack.c.b16 %v1260, %v1259
      %v1278 = vpack.c.b16 %v1262, %v1261
      %1295 = vmatprep.subr.bf16.mxu0 0
      %1296 = vmatpush1.bf16.msra.mxu0 %v1270
      %1297 = vmatprep.subr.bf16.mxu0 0
      %1298 = vmatpush1.bf16.msra.mxu0 %v1269
      %1299 = vmatprep.subr.bf16.mxu0 0
      %1300 = vmatpush1.bf16.msra.mxu0 %v1268
      %1301 = vmatprep.subr.bf16.mxu0 0
      %1302 = vmatpush1.bf16.msra.mxu0 %v1267
      %1303 = vmatprep.subr.bf16.mxu0 0
      %1304 = vmatpush1.bf16.msra.mxu0 %v1266
      %1305 = vmatprep.subr.bf16.mxu0 0
      %1306 = vmatpush1.bf16.msra.mxu0 %v1265
      %1307 = vmatprep.subr.bf16.mxu0 0
      %1308 = vmatpush1.bf16.msra.mxu0 %v1264
      %1309 = vmatprep.subr.bf16.mxu0 0
      %1310 = vmatpush1.bf16.msra.mxu0 %v1263
      %1311 = vmatprep.subr.bf16.mxu0 0
      %1312 = vmatpush2.bf16.msra.mxu0 %v1278
      %1313 = vmatprep.subr.bf16.mxu0 0
      %1314 = vmatpush2.bf16.msra.mxu0 %v1277
      %1315 = vmatprep.subr.bf16.mxu0 0
      %1316 = vmatpush2.bf16.msra.mxu0 %v1276
      %1317 = vmatprep.subr.bf16.mxu0 0
      %1318 = vmatpush2.bf16.msra.mxu0 %v1275
      %1319 = vmatprep.subr.bf16.mxu0 0
      %1320 = vmatpush2.bf16.msra.mxu0 %v1274
      %1321 = vmatprep.subr.bf16.mxu0 0
      %1322 = vmatpush2.bf16.msra.mxu0 %v1273
      %1323 = vmatprep.subr.bf16.mxu0 0
      %1324 = vmatpush2.bf16.msra.mxu0 %v1272
      %1325 = vmatprep.subr.bf16.mxu0 0
      %1326 = vmatpush2.bf16.msra.mxu0 %v1271
      %1327 = vmatprep.mubr.bf16.mxu0 %v1145
      %1328 = vmatmul.mubr.bf16.gmra.mxu0 %v1144
      %v1329 = vpop.f32.mrf.mxu0
      %v1330 = vadd.f32 %v1197, %v1329
      %v1331 = vpop.f32.mrf.mxu0
      %v1332 = vpop.f32.mrf.mxu0
      %v1333 = vadd.f32 %v1197, %v1332
      %v1334 = vpop.f32.mrf.mxu0
      %1335 = vmatprep.mubr.bf16.mxu0 %v1147
      %1336 = vmatmul.mubr.bf16.gmra.mxu0 %v1146
      %v1337 = vpop.f32.mrf.mxu0
      %v1338 = vadd.f32 %v1197, %v1337
      %v1339 = vpop.f32.mrf.mxu0
      %v1340 = vpop.f32.mrf.mxu0
      %v1341 = vadd.f32 %v1197, %v1340
      %v1342 = vpop.f32.mrf.mxu0
      %1343 = vmatprep.mubr.bf16.mxu0 %v1149
      %1344 = vmatmul.mubr.bf16.gmra.mxu0 %v1148
      %v1345 = vpop.f32.mrf.mxu0
      %v1346 = vadd.f32 %v1197, %v1345
      %v1347 = vpop.f32.mrf.mxu0
      %v1348 = vpop.f32.mrf.mxu0
      %v1349 = vadd.f32 %v1197, %v1348
      %v1350 = vpop.f32.mrf.mxu0
      %1351 = vmatprep.mubr.bf16.mxu0 %v1151
      %1352 = vmatmul.mubr.bf16.gmra.mxu0 %v1150
      %v1353 = vpop.f32.mrf.mxu0
      %v1354 = vadd.f32 %v1197, %v1353
      %v1355 = vpop.f32.mrf.mxu0
      %v1356 = vpop.f32.mrf.mxu0
      %v1357 = vadd.f32 %v1197, %v1356
      %v1358 = vpop.f32.mrf.mxu0
      %1359 = vmatprep.mubr.bf16.mxu0 %v1153
      %1360 = vmatmul.mubr.bf16.gmra.mxu0 %v1152
      %v1361 = vpop.f32.mrf.mxu0
      %v1362 = vadd.f32 %v1197, %v1361
      %v1363 = vpop.f32.mrf.mxu0
      %v1364 = vpop.f32.mrf.mxu0
      %v1365 = vadd.f32 %v1197, %v1364
      %v1366 = vpop.f32.mrf.mxu0
      %1367 = vmatprep.mubr.bf16.mxu0 %v1155
      %1368 = vmatmul.mubr.bf16.gmra.mxu0 %v1154
      %v1369 = vpop.f32.mrf.mxu0
      %v1370 = vadd.f32 %v1197, %v1369
      %v1371 = vpop.f32.mrf.mxu0
      %v1372 = vpop.f32.mrf.mxu0
      %v1373 = vadd.f32 %v1197, %v1372
      %v1374 = vpop.f32.mrf.mxu0
      %1375 = vmatprep.mubr.bf16.mxu0 %v1157
      %1376 = vmatmul.mubr.bf16.gmra.mxu0 %v1156
      %v1377 = vpop.f32.mrf.mxu0
      %v1378 = vadd.f32 %v1197, %v1377
      %v1379 = vpop.f32.mrf.mxu0
      %v1380 = vpop.f32.mrf.mxu0
      %v1381 = vadd.f32 %v1197, %v1380
      %v1382 = vpop.f32.mrf.mxu0
      %1383 = vmatprep.mubr.bf16.mxu0 %v1159
      %1384 = vmatmul.mubr.bf16.gmra.mxu0 %v1158
      %v1385 = vpop.f32.mrf.mxu0
      %v1386 = vadd.f32 %v1197, %v1385
      %v1387 = vpop.f32.mrf.mxu0
      %v1388 = vpop.f32.mrf.mxu0
      %v1389 = vadd.f32 %v1197, %v1388
      %v1390 = vpop.f32.mrf.mxu0
      %1391 = vdwg.mxu0
      %1392 = vxpose.xlu0.b32.start [1/16] %v1330, 128
      %1393 = vxpose.xlu0.b32.cont [2/16] %v1333, 128
      %1394 = vxpose.xlu0.b32.cont [3/16] %v1338, 128
      %1395 = vxpose.xlu0.b32.cont [4/16] %v1341, 128
      %1396 = vxpose.xlu0.b32.cont [5/16] %v1346, 128
      %1397 = vxpose.xlu0.b32.cont [6/16] %v1349, 128
      %1398 = vxpose.xlu0.b32.cont [7/16] %v1354, 128
      %1399 = vxpose.xlu0.b32.cont [8/16] %v1357, 128
      %1400 = vxpose.xlu0.b32.cont [9/16] %v1362, 128
      %1401 = vxpose.xlu0.b32.cont [10/16] %v1365, 128
      %1402 = vxpose.xlu0.b32.cont [11/16] %v1370, 128
      %1403 = vxpose.xlu0.b32.cont [12/16] %v1373, 128
      %1404 = vxpose.xlu0.b32.cont [13/16] %v1378, 128
      %1405 = vxpose.xlu0.b32.cont [14/16] %v1381, 128
      %1406 = vxpose.xlu0.b32.cont [15/16] %v1386, 128
      %1407 = vxpose.xlu0.b32.end [16/16] %v1389, 128
      %v1408 = vpop.trf.xlu0
      %v1409 = vpop.trf.xlu0
      %v1410 = vpop.trf.xlu0
      %v1411 = vpop.trf.xlu0
      %v1412 = vpop.trf.xlu0
      %v1413 = vpop.trf.xlu0
      %v1414 = vpop.trf.xlu0
      %v1415 = vpop.trf.xlu0
      %v1416 = vpop.trf.xlu0
      %v1417 = vpop.trf.xlu0
      %v1418 = vpop.trf.xlu0
      %v1419 = vpop.trf.xlu0
      %v1420 = vpop.trf.xlu0
      %v1421 = vpop.trf.xlu0
      %v1422 = vpop.trf.xlu0
      %v1423 = vpop.trf.xlu0
      %v1424 = vmin.f32 %v1408, %v1416
      %1425 = vst [vmem:[%s352] sm:$0x1] %v1424
      %p1426 = scmp.lt.s32.totalorder %s20, 3
      %s1427 = scalar_select %p1426, %s20, 3
      %s1428 = scalar_lea.vmem %s9, %s1427
      // Predicated region
      $region57: #{twinq_forward.1} parent=55 // pred_check
        %p1429 = pneg %p237
      $region58: #{twinq_forward.1} parent=55 // pred_check_branch
        %1431 = sbr.rel (%p1429) target = $region60
      $region59: #{twinq_forward.1} parent=55 // pred_region
        _
      $region60: #{twinq_forward.1} parent=55 // pred_fallthru
        _
    $region56: #{twinq_forward.1} parent=5 // pred_fallthru
      _
    %p1432 = scmp.le.s32.totalorder 2, %s15
    // Predicated region
    $region61: #{twinq_forward.1} parent=5 // pred_check
      %p1433 = pneg %p1432
    $region62: #{twinq_forward.1} parent=5 // pred_check_branch
      %1435 = sbr.rel (%p1433) target = $region64
    $region63: #{twinq_forward.1} parent=5 // pred_region
      %s1436 = ssub.s32 %s15, 2
      // Predicated region
      $region65: #{twinq_forward.1} parent=63 // pred_check
        %p1437 = pneg %p243
      $region66: #{twinq_forward.1} parent=63 // pred_check_branch
        %1439 = sbr.rel (%p1437) target = $region68
      $region67: #{twinq_forward.1} parent=63 // pred_region
        %p1440 = scmp.lt.s32.totalorder %s21, 3
        %s1441 = scalar_select %p1440, %s21, 3
        %s1442 = scalar_lea.vmem %s9, %s1441
      $region68: #{twinq_forward.1} parent=63 // pred_fallthru
        _
    $region64: #{twinq_forward.1} parent=5 // pred_fallthru
      _
  $region6: #{twinq_forward.1} parent=0 // loop_footer
    %s19 = sadd.s32 1, %s15
  $region7: #{twinq_forward.1} parent=0 // loop_footer_branch
    %14 = sbr.rel target = $region3
  $region8: #{twinq_forward.1} parent=0 // loop_exit
    _

</llo_original>
